<compile_context>
chip_gen: v7x
topology: tpu7x:2x2x1
jax: 0.10.0
libtpu: 0.0.40
codegen_flags: <defaults>
</compile_context>

<pallas_src>
import jax
import jax.numpy as jnp
from jax.experimental import pallas as pl
from jax.experimental.pallas import tpu as pltpu


# ----------------------------------------------------------------------------
# Fast path: metadata-only view via an aliased no-op kernel.
# ----------------------------------------------------------------------------
def _alias_view_kernel(x_ref, o_ref, anchor_ref):
    # Output HBM buffer is aliased to the input buffer, so the bytes are
    # already in place — nothing to move.  The SMEM store below is a trivial
    # anchor op so the kernel body is never empty.
    del x_ref, o_ref
    anchor_ref[0] = jnp.int32(0)


def _alias_view(x):
    """Identity pallas_call with the output aliased onto the input buffer."""
    return pl.pallas_call(
        _alias_view_kernel,
        out_shape=jax.ShapeDtypeStruct(x.shape, x.dtype),
        in_specs=[pl.BlockSpec(memory_space=pl.ANY)],   # raw HBM ref, no auto-DMA
        out_specs=pl.BlockSpec(memory_space=pl.ANY),
        scratch_shapes=[pltpu.SMEM((1,), jnp.int32)],
        input_output_aliases={0: 0},
    )(x)


# ----------------------------------------------------------------------------
# Optional explicit-copy path: lane-dense, multi-MiB, dtype-aware tiling.
# ----------------------------------------------------------------------------
def _copy_kernel(x_ref, o_ref):
    o_ref[...] = x_ref[...]


def _copy_through_vmem(flat):
    """Stream flat data through a tiled copy kernel (HBM -> VMEM -> HBM)."""
    total = flat.shape[0]
    itemsize = jnp.dtype(flat.dtype).itemsize
    # dtype-aware sublane multiple: f32 -> 8, bf16 -> 16, int8/fp8 -> 32.
    sub = {4: 8, 2: 16, 1: 32}.get(itemsize, 8)

    # Prefer the widest lane dimension (large multiple of 128) that divides
    # the total — wide, lane-dense output tiles give unmasked full-width vst.
    lanes = None
    for cand in (4096, 2048, 1024, 512, 256, 128):
        if total % cand == 0:
            lanes = cand
            break

    if lanes is None:
        # Tail-safe fallback for sizes not divisible by 128: pad (glue) to a
        # full (sub x 128) multiple, copy, then slice the valid prefix back.
        padded = sub * 128 * pl.cdiv(total, sub * 128)
        flat_p = jnp.pad(flat, (0, padded - total))
        return _copy_through_vmem(flat_p)[:total]

    rows = total // lanes
    x2 = flat.reshape(rows, lanes)

    # ~2 MiB blocks: large enough to amortize the ~0.35 us/grid-step overhead,
    # small enough that double-buffered in+out (4 buffers) stays well under
    # the 32 MiB default scoped VMEM on v7x (64 MiB physical).
    target_bytes = 2 * 1024 * 1024
    block_rows = max(sub, (target_bytes // (lanes * itemsize)) // sub * sub)
    block_rows = min(rows, block_rows)

    grid = (pl.cdiv(rows, block_rows),)
    copied = pl.pallas_call(
        _copy_kernel,
        out_shape=jax.ShapeDtypeStruct((rows, lanes), flat.dtype),
        grid=grid,
        in_specs=[pl.BlockSpec((block_rows, lanes), lambda i: (i, 0))],
        out_specs=pl.BlockSpec((block_rows, lanes), lambda i: (i, 0)),
        compiler_params=pltpu.CompilerParams(
            dimension_semantics=("parallel",)  # megacore-shardable on v7x
        ),
    )(x2)
    return copied.reshape(total)


# ----------------------------------------------------------------------------
# torch.view shape semantics.
# ----------------------------------------------------------------------------
def _normalize_shape_args(args):
    if len(args) == 1 and isinstance(args[0], (tuple, list)):
        return tuple(args[0])
    return tuple(args)


def _resolve_shape(total, shape):
    """Mimic torch.view shape resolution, including a single -1."""
    shape = list(shape)
    if shape.count(-1) > 1:
        raise ValueError("only one dimension can be inferred")
    if -1 in shape:
        known = 1
        for s in shape:
            if s != -1:
                known *= s
        if known == 0 or total % known != 0:
            raise ValueError(f"cannot view {total} elements as {tuple(shape)}")
        shape[shape.index(-1)] = total // known
    prod = 1
    for s in shape:
        prod *= s
    if prod != total:
        raise ValueError(f"cannot view {total} elements as {tuple(shape)}")
    return tuple(shape)


def pallas_view(x, *shape, copy=False):
    """Equivalent of `View(*shape)(x)` == `x.view(*shape)` in PyTorch.

    copy=False (default): aliased no-op kernel + metadata reshape (no HBM
                          traffic inside the kernel; donate the input under
                          jit to make it fully zero-copy).
    copy=True:            explicit tiled copy through VMEM (for when a fresh
                          buffer is required).
    """
    # TODO(synk): torch.view raises on non-contiguous tensors; JAX arrays are
    # always logically contiguous, so that error path has no equivalent here.
    total = x.size
    out_shape = _resolve_shape(total, _normalize_shape_args(shape))

    if not copy:
        return _alias_view(x).reshape(out_shape)     # glue: metadata reshape

    flat = x.reshape(-1)                              # glue: metadata flatten
    return _copy_through_vmem(flat).reshape(out_shape)


class View:
    """Drop-in analogue of the PyTorch View module."""

    def __init__(self, *args):
        self.shape = args

    def __call__(self, x):
        return pallas_view(x, self.shape)


if __name__ == "__main__":
    key = jax.random.PRNGKey(0)
    # Small NCHW input consistent with a typical use of View inside Sequential.
    x = jax.random.normal(key, (2, 4, 16, 16), dtype=jnp.float32)
    ref = x.reshape(2, -1)

    # Default (aliased, metadata-only) path: View(2, -1)
    y = jax.block_until_ready(pallas_view(x, 2, -1))
    assert y.shape == (2, 4 * 16 * 16), y.shape
    assert y.dtype == x.dtype
    assert jnp.array_equal(y, ref)

    # Multi-dim target shape through the module-style wrapper.
    y2 = jax.block_until_ready(View(2, 4, 256)(x))
    assert jnp.array_equal(y2, x.reshape(2, 4, 256))

    # Explicit-copy path exercising the lane-dense tiled copy kernel (f32).
    y3 = jax.block_until_ready(pallas_view(x, 2, -1, copy=True))
    assert jnp.array_equal(y3, ref)

    # bf16 exercises the dtype-aware sublane multiple (16) in the copy path.
    xb = x.astype(jnp.bfloat16)
    y4 = jax.block_until_ready(pallas_view(xb, -1, 128, copy=True))
    assert jnp.array_equal(y4, xb.reshape(-1, 128))

    # Non-128-divisible total exercises the padded fallback of the copy path.
    x_odd = jax.random.normal(key, (2, 3, 5), dtype=jnp.float32)
    y5 = jax.block_until_ready(pallas_view(x_odd, 6, 5, copy=True))
    assert jnp.array_equal(y5, x_odd.reshape(6, 5))

    print("KERNEL_OK")
</pallas_src>

<mosaic_0001>
module attributes {stable_mosaic.version = 11 : i64} {
  func.func @_alias_view_kernel(%arg0: memref<2x4x16x16xf32, #tpu.memory_space<any>>, %arg1: memref<2x4x16x16xf32, #tpu.memory_space<any>>, %arg2: memref<1xi32, #tpu.memory_space<smem>>) attributes {dimension_semantics = [], scalar_prefetch = 0 : i64, scratch_operands = 1 : i64, tpu.core_type = #tpu.core_type<tc>} {
    %c0_i32 = arith.constant 0 : i32
    %c0 = arith.constant 0 : index
    %0 = memref.load %arg2[%c0] : memref<1xi32, #tpu.memory_space<smem>>
    memref.store %c0_i32, %arg2[%c0] : memref<1xi32, #tpu.memory_space<smem>>
    return
  }
}

</mosaic_0001>

<llo_original>
// kernel: tpu_custom_call.1
$region0: #{tpu_custom_call.1}
  #allocation0 [shape = 'u32[]', space=smem, size = 0x4, offset = 0x4, fixed_abs, tag = 'smem constant byte address 0x4 - core index']
  #allocation1 [shape = 'u32[144,128]{1,0:T(1,128)}', space=vmem, size = 0x12000, scoped, tag = 'internal scratch']
  #allocation2 [shape = 's32[1]{0:T(128)}', space=smem, size = 0x200, scoped, tag = 'scratch operand']
  %s0 = inlined_call_operand.hbm [shape: f32[2,4,16,16], index: 0, kind: input, shape index: {}, may-alias: {0,1}]
  %s1 = inlined_call_operand.hbm [shape: f32[2,4,16,16], index: 1, kind: output, shape index: {}, may-alias: {0,1}]
  %s2 = sld [smem:[#allocation0]]
  $region2: #{tpu_custom_call.1} parent=0
    _
  %s4 = ssub.s32 1, %s2
  %s5 = scalar_select 0, %s4, %s2
  %s6 = scalar_lea.smem [#allocation2], 0
  %7 = sst [smem:[%s6]] 0

</llo_original>
